<compile_context>
chip_gen: v7x
topology: tpu7x:2x2x1
jax: 0.10.0
libtpu: 0.0.40
codegen_flags: <defaults>
</compile_context>

<pallas_src>
import jax
import jax.numpy as jnp
from jax.experimental import pallas as pl
from jax.experimental.pallas import tpu as pltpu


# ---- problem configuration (mirrors adaptable_partial_HNN.__init__) --------
INPUT_SIZE = 8              # dim of qp
N_PARAMS = 2                # n_params
NUM_HIDDEN = 2              # num_hidden
NUM_NEURONS = (32, 32)      # num_neurons
BATCH = 8

D_PAD = 128                 # lane-dense feature width (one vreg lane span)
H_COL = D_PAD - 1           # output column carrying H
_CONST_ROWS = 8             # b1, b2, we, hmask, be (tile-padded to 8 rows)

MAX_TILE_B = 6144           # keeps worst-case footprint < ~40 MiB (v7x safe)
_BYTES_PER_ROW = 6 * 1024   # rough per-row VMEM estimate (blocks + temps)


def _round_up(n, m):
    return ((n + m - 1) // m) * m


def _choose_tiling(b, tile_b_max):
    """Pick (tile, padded_batch, n_steps): 16-row aligned tiles, no doubled
    padding, and >=2 grid steps (v7x dual-TC sharding) when the batch allows."""
    b_al = _round_up(max(b, 1), 16)
    n_steps = -(-b_al // tile_b_max)
    if n_steps == 1 and b_al >= 32:
        n_steps = 2
    tile = _round_up(-(-b_al // n_steps), 16)
    return tile, tile * n_steps, n_steps


# --------------------------------------------------------------------------
# Kernel: fused forward + analytic backward for the 2-hidden-layer tanh MLP.
# --------------------------------------------------------------------------
def hnn_kernel(x_ref, w_ref, c_ref, out_ref):
    x = x_ref[...]                                    # (TB, 128) f32

    # static, tile-aligned views of the resident bf16 weight buffer
    w1t = w_ref[0 * D_PAD:1 * D_PAD, :]               # W1^T          (forward)
    w2t = w_ref[1 * D_PAD:2 * D_PAD, :]               # W2^T          (forward)
    w2s = w_ref[2 * D_PAD:3 * D_PAD, :]               # diag(we) @ W2 (backward)
    w1s = w_ref[3 * D_PAD:4 * D_PAD, :]               # sign * W1     (backward)

    b1 = c_ref[0:1, :]                                # (1, 128) f32
    b2 = c_ref[1:2, :]
    we = c_ref[2:3, :]
    hmask = c_ref[3:4, :]                             # 1 at H_COL, 0 elsewhere
    be = c_ref[4:5, 0:1]                              # (1, 1) energy bias

    # ---------------- forward: bf16 MXU operands, f32 accumulate/elementwise
    a1 = jnp.tanh(jnp.dot(x.astype(jnp.bfloat16), w1t,
                          preferred_element_type=jnp.float32) + b1)
    a2 = jnp.tanh(jnp.dot(a1.astype(jnp.bfloat16), w2t,
                          preferred_element_type=jnp.float32) + b2)

    # energy layer (out_features == 1) on VPU/XLU, not a degenerate MXU matmul
    h = jnp.sum(a2 * we, axis=-1, keepdims=True)      # (TB, 1)

    # ---------------- analytic backward of sum(H) wrt x ----------------------
    # (we and sign already folded into w2s / w1s on the host)
    t2 = 1.0 - a2 * a2
    g1 = jnp.dot(t2.astype(jnp.bfloat16), w2s,
                 preferred_element_type=jnp.float32) * (1.0 - a1 * a1)
    gx = jnp.dot(g1.astype(jnp.bfloat16), w1s,
                 preferred_element_type=jnp.float32)  # (TB, 128), already signed

    # single lane-dense store: signed gradient + H packed into column H_COL
    out_ref[...] = gx + (h + be) * hmask


# --------------------------------------------------------------------------
# Host-side packing: bf16 matmul weights (512,128) + f32 constants (8,128).
# --------------------------------------------------------------------------
def _pack_weights(weights, potential):
    w1, b1, w2, b2, we, be = [jnp.asarray(a, jnp.float32) for a in weights]
    n0 = w1.shape[0]
    n1 = w2.shape[0]
    sign_val = -1.0 if potential else 1.0

    def pad2(a):
        buf = jnp.zeros((D_PAD, D_PAD), jnp.float32)
        return buf.at[:a.shape[0], :a.shape[1]].set(a)

    wpack = jnp.concatenate(
        [pad2(w1.T),                       # forward layer 1
         pad2(w2.T),                       # forward layer 2
         pad2(we.reshape(-1, 1) * w2),     # backward: diag(we) @ W2
         pad2(sign_val * w1)],             # backward: sign * W1
        axis=0).astype(jnp.bfloat16)       # (512, 128) bf16

    consts = jnp.zeros((_CONST_ROWS, D_PAD), jnp.float32)
    consts = consts.at[0, :n0].set(b1.reshape(-1))
    consts = consts.at[1, :n1].set(b2.reshape(-1))
    consts = consts.at[2, :n1].set(we.reshape(-1))
    consts = consts.at[3, H_COL].set(1.0)              # hmask
    consts = consts.at[4, 0].set(be.reshape(()))       # scalar energy bias
    return wpack, consts


# --------------------------------------------------------------------------
# Wrapper: pads x to (B_pad, 128), runs the batched grid, unpacks (H, grad).
# --------------------------------------------------------------------------
def adaptable_partial_hnn_forward(qp, params, weights, *, potential=True,
                                  tile_b=1024):
    qp = jnp.asarray(qp, jnp.float32)
    if potential:
        x = jnp.concatenate([qp, jnp.asarray(params, jnp.float32)], axis=1)
    else:
        x = qp
    b, d_x = x.shape

    tile, b_pad, n_steps = _choose_tiling(b, max(16, min(int(tile_b), MAX_TILE_B)))

    x_pad = jnp.zeros((b_pad, D_PAD), jnp.float32).at[:b, :d_x].set(x)
    wpack, consts = _pack_weights(weights, potential)

    # Only raise scoped VMEM when a large user-requested tile actually needs
    # it (default tile stays ~6 MiB, under v5e's 16 MiB default scoped VMEM);
    # cap at 48 MiB so it always fits v7x's 64 MiB physical VMEM.
    cp_kwargs = {"dimension_semantics": ("parallel",)}
    vmem_est = tile * _BYTES_PER_ROW + (1 << 20)
    if vmem_est > 12 * 1024 * 1024:
        cp_kwargs["vmem_limit_bytes"] = int(min(vmem_est * 3 // 2,
                                                48 * 1024 * 1024))

    out = pl.pallas_call(
        hnn_kernel,
        out_shape=jax.ShapeDtypeStruct((b_pad, D_PAD), jnp.float32),
        grid=(n_steps,),
        in_specs=[
            pl.BlockSpec((tile, D_PAD), lambda i: (i, 0)),
            pl.BlockSpec((4 * D_PAD, D_PAD), lambda i: (0, 0)),    # resident
            pl.BlockSpec((_CONST_ROWS, D_PAD), lambda i: (0, 0)),  # resident
        ],
        out_specs=pl.BlockSpec((tile, D_PAD), lambda i: (i, 0)),
        compiler_params=pltpu.CompilerParams(**cp_kwargs),
    )(x_pad, wpack, consts)

    h = out[:b, H_COL:H_COL + 1]        # (B, 1)  energy
    grad = out[:b, :INPUT_SIZE]         # (B, input_size), sign already applied
    return h, grad


# --------------------------------------------------------------------------
# Deterministic init mimicking nn.Linear default (uniform ±1/sqrt(fan_in)).
# --------------------------------------------------------------------------
def init_weights(key, potential):
    d_in0 = INPUT_SIZE + N_PARAMS if potential else INPUT_SIZE
    dims_in = (d_in0,) + NUM_NEURONS[:-1] + (NUM_NEURONS[-1],)
    dims_out = NUM_NEURONS + (1,)
    ws, bs = [], []
    for d_in, d_out in zip(dims_in, dims_out):
        key, kw, kb = jax.random.split(key, 3)
        bound = 1.0 / jnp.sqrt(jnp.float32(d_in))
        ws.append(jax.random.uniform(kw, (d_out, d_in), jnp.float32, -bound, bound))
        bs.append(jax.random.uniform(kb, (1, d_out), jnp.float32, -bound, bound))
    return (ws[0], bs[0], ws[1], bs[1], ws[2], bs[2])


def reference_forward(qp, params, weights, potential):
    """Pure-JAX f32 reference matching the torch module semantics (autograd)."""
    w1, b1, w2, b2, we, be = weights

    def h_fn(qp_):
        x = jnp.concatenate([qp_, params], axis=1) if potential else qp_
        a1 = jnp.tanh(x @ w1.T + b1)
        a2 = jnp.tanh(a1 @ w2.T + b2)
        return a2 @ we.T + be

    h = h_fn(qp)
    g = jax.grad(lambda z: jnp.sum(h_fn(z)))(qp)
    return (h, -g) if potential else (h, g)


if __name__ == "__main__":
    key = jax.random.PRNGKey(0)
    k_qp, k_prm, k_wv, k_wk, k_qp2, k_prm2 = jax.random.split(key, 6)

    # bf16 matmul operands -> tolerance relaxed vs the f32 autograd reference.
    ATOL = RTOL = 3e-2

    # Small-batch check (matches the module's typical per-step usage), both nets.
    qp = jax.random.normal(k_qp, (BATCH, INPUT_SIZE), jnp.float32)
    params = jax.random.normal(k_prm, (BATCH, N_PARAMS), jnp.float32)
    for potential, k_w in ((True, k_wv), (False, k_wk)):
        weights = init_weights(k_w, potential)
        h, g = jax.block_until_ready(
            adaptable_partial_hnn_forward(qp, params, weights,
                                          potential=potential))
        h_ref, g_ref = reference_forward(qp, params, weights, potential)
        assert jnp.allclose(h, h_ref, atol=ATOL, rtol=RTOL), potential
        assert jnp.allclose(g, g_ref, atol=ATOL, rtol=RTOL), potential

    # Larger batch exercises the multi-step parallel grid and row padding.
    qp_l = jax.random.normal(k_qp2, (300, INPUT_SIZE), jnp.float32)
    params_l = jax.random.normal(k_prm2, (300, N_PARAMS), jnp.float32)
    weights_v = init_weights(k_wv, True)
    h_l, g_l = jax.block_until_ready(
        adaptable_partial_hnn_forward(qp_l, params_l, weights_v, potential=True))
    h_lr, g_lr = reference_forward(qp_l, params_l, weights_v, True)
    assert jnp.allclose(h_l, h_lr, atol=ATOL, rtol=RTOL)
    assert jnp.allclose(g_l, g_lr, atol=ATOL, rtol=RTOL)

    print("KERNEL_OK")
</pallas_src>

<mosaic_0001>
module attributes {stable_mosaic.version = 11 : i64} {
  func.func @hnn_kernel(%arg0: i32, %arg1: memref<16x128xf32, #tpu.memory_space<vmem>>, %arg2: memref<512x128xbf16, #tpu.memory_space<vmem>>, %arg3: memref<8x128xf32, #tpu.memory_space<vmem>>, %arg4: memref<16x128xf32, #tpu.memory_space<vmem>>) attributes {dimension_semantics = [#tpu.dimension_semantics<parallel>], iteration_bounds = array<i64: 1>, scalar_prefetch = 0 : i64, scratch_operands = 0 : i64, tpu.core_type = #tpu.core_type<tc>, window_params = [{transform_indices = @transform_0, window_bounds = array<i64: 16, 128>}, {pipeline_mode = #tpu.pipeline_mode<synchronous>, transform_indices = @transform_1, window_bounds = array<i64: 512, 128>}, {pipeline_mode = #tpu.pipeline_mode<synchronous>, transform_indices = @transform_2, window_bounds = array<i64: 8, 128>}, {transform_indices = @transform_3, window_bounds = array<i64: 16, 128>}]} {
    %c0 = arith.constant 0 : index
    %c0_0 = arith.constant 0 : index
    %0 = vector.load %arg1[%c0, %c0_0] : memref<16x128xf32, #tpu.memory_space<vmem>>, vector<16x128xf32>
    %c0_1 = arith.constant 0 : index
    %c0_2 = arith.constant 0 : index
    %1 = vector.load %arg2[%c0_1, %c0_2] : memref<512x128xbf16, #tpu.memory_space<vmem>>, vector<128x128xbf16>
    %c128 = arith.constant 128 : index
    %c0_3 = arith.constant 0 : index
    %2 = vector.load %arg2[%c128, %c0_3] : memref<512x128xbf16, #tpu.memory_space<vmem>>, vector<128x128xbf16>
    %c256 = arith.constant 256 : index
    %c0_4 = arith.constant 0 : index
    %3 = vector.load %arg2[%c256, %c0_4] : memref<512x128xbf16, #tpu.memory_space<vmem>>, vector<128x128xbf16>
    %c384 = arith.constant 384 : index
    %c0_5 = arith.constant 0 : index
    %4 = vector.load %arg2[%c384, %c0_5] : memref<512x128xbf16, #tpu.memory_space<vmem>>, vector<128x128xbf16>
    %c0_6 = arith.constant 0 : index
    %c0_7 = arith.constant 0 : index
    %5 = vector.load %arg3[%c0_6, %c0_7] : memref<8x128xf32, #tpu.memory_space<vmem>>, vector<1x128xf32>
    %c1 = arith.constant 1 : index
    %c0_8 = arith.constant 0 : index
    %6 = vector.load %arg3[%c1, %c0_8] : memref<8x128xf32, #tpu.memory_space<vmem>>, vector<1x128xf32>
    %c2 = arith.constant 2 : index
    %c0_9 = arith.constant 0 : index
    %7 = vector.load %arg3[%c2, %c0_9] : memref<8x128xf32, #tpu.memory_space<vmem>>, vector<1x128xf32>
    %c3 = arith.constant 3 : index
    %c0_10 = arith.constant 0 : index
    %8 = vector.load %arg3[%c3, %c0_10] : memref<8x128xf32, #tpu.memory_space<vmem>>, vector<1x128xf32>
    %c4 = arith.constant 4 : index
    %c0_11 = arith.constant 0 : index
    %9 = vector.load %arg3[%c4, %c0_11] : memref<8x128xf32, #tpu.memory_space<vmem>>, vector<1x1xf32>
    %10 = arith.truncf %0 : vector<16x128xf32> to vector<16x128xbf16>
    %cst = arith.constant dense<0.000000e+00> : vector<16x128xf32>
    %11 = tpu.matmul %10, %1, %cst {dimension_numbers = #tpu.dot_dimension_numbers<[1], [0], [0], [1], [0, 0, 1, 1], [], []>} : vector<16x128xbf16>, vector<128x128xbf16>, vector<16x128xf32> -> vector<16x128xf32>
    %12 = vector.broadcast %5 : vector<1x128xf32> to vector<16x128xf32>
    %13 = arith.addf %11, %12 : vector<16x128xf32>
    %14 = math.tanh %13 : vector<16x128xf32>
    %15 = arith.truncf %14 : vector<16x128xf32> to vector<16x128xbf16>
    %cst_12 = arith.constant dense<0.000000e+00> : vector<16x128xf32>
    %16 = tpu.matmul %15, %2, %cst_12 {dimension_numbers = #tpu.dot_dimension_numbers<[1], [0], [0], [1], [0, 0, 1, 1], [], []>} : vector<16x128xbf16>, vector<128x128xbf16>, vector<16x128xf32> -> vector<16x128xf32>
    %17 = vector.broadcast %6 : vector<1x128xf32> to vector<16x128xf32>
    %18 = arith.addf %16, %17 : vector<16x128xf32>
    %19 = math.tanh %18 : vector<16x128xf32>
    %20 = vector.broadcast %7 : vector<1x128xf32> to vector<16x128xf32>
    %21 = arith.mulf %19, %20 : vector<16x128xf32>
    %cst_13 = arith.constant dense<0.000000e+00> : vector<16xf32>
    %22 = vector.multi_reduction <add>, %21, %cst_13 [1] : vector<16x128xf32> to vector<16xf32>
    %23 = vector.shape_cast %22 : vector<16xf32> to vector<16x1xf32>
    %24 = arith.mulf %19, %19 : vector<16x128xf32>
    %cst_14 = arith.constant 1.000000e+00 : f32
    %25 = vector.broadcast %cst_14 : f32 to vector<16x128xf32>
    %26 = arith.subf %25, %24 : vector<16x128xf32>
    %27 = arith.truncf %26 : vector<16x128xf32> to vector<16x128xbf16>
    %cst_15 = arith.constant dense<0.000000e+00> : vector<16x128xf32>
    %28 = tpu.matmul %27, %3, %cst_15 {dimension_numbers = #tpu.dot_dimension_numbers<[1], [0], [0], [1], [0, 0, 1, 1], [], []>} : vector<16x128xbf16>, vector<128x128xbf16>, vector<16x128xf32> -> vector<16x128xf32>
    %29 = arith.mulf %14, %14 : vector<16x128xf32>
    %cst_16 = arith.constant 1.000000e+00 : f32
    %30 = vector.broadcast %cst_16 : f32 to vector<16x128xf32>
    %31 = arith.subf %30, %29 : vector<16x128xf32>
    %32 = arith.mulf %28, %31 : vector<16x128xf32>
    %33 = arith.truncf %32 : vector<16x128xf32> to vector<16x128xbf16>
    %cst_17 = arith.constant dense<0.000000e+00> : vector<16x128xf32>
    %34 = tpu.matmul %33, %4, %cst_17 {dimension_numbers = #tpu.dot_dimension_numbers<[1], [0], [0], [1], [0, 0, 1, 1], [], []>} : vector<16x128xbf16>, vector<128x128xbf16>, vector<16x128xf32> -> vector<16x128xf32>
    %35 = vector.broadcast %9 : vector<1x1xf32> to vector<16x1xf32>
    %36 = arith.addf %23, %35 : vector<16x1xf32>
    %37 = vector.broadcast %36 : vector<16x1xf32> to vector<16x128xf32>
    %38 = vector.broadcast %8 : vector<1x128xf32> to vector<16x128xf32>
    %39 = arith.mulf %37, %38 : vector<16x128xf32>
    %40 = arith.addf %34, %39 : vector<16x128xf32>
    %c0_18 = arith.constant 0 : index
    %c0_19 = arith.constant 0 : index
    %41 = vector.load %arg4[%c0_18, %c0_19] : memref<16x128xf32, #tpu.memory_space<vmem>>, vector<16x128xf32>
    tpu.vector_store %arg4[%c0_18, %c0_19], %40 {strides = array<i32>} : memref<16x128xf32, #tpu.memory_space<vmem>>, vector<16x128xf32>,
    return
  }
  func.func @transform_0(%arg0: i32) -> (i32, i32) {
    %c0_i32 = arith.constant 0 : i32
    %c0_i32_0 = arith.constant 0 : i32
    return %arg0, %c0_i32 : i32, i32
  }
  func.func @transform_1(%arg0: i32) -> (i32, i32) {
    %c0_i32 = arith.constant 0 : i32
    %c0_i32_0 = arith.constant 0 : i32
    %c0_i32_1 = arith.constant 0 : i32
    return %c0_i32, %c0_i32_0 : i32, i32
  }
  func.func @transform_2(%arg0: i32) -> (i32, i32) {
    %c0_i32 = arith.constant 0 : i32
    %c0_i32_0 = arith.constant 0 : i32
    %c0_i32_1 = arith.constant 0 : i32
    return %c0_i32, %c0_i32_0 : i32, i32
  }
  func.func @transform_3(%arg0: i32) -> (i32, i32) {
    %c0_i32 = arith.constant 0 : i32
    %c0_i32_0 = arith.constant 0 : i32
    return %arg0, %c0_i32 : i32, i32
  }
}

</mosaic_0001>

<llo_original>
// kernel: tpu_custom_call.1
$region0: #{tpu_custom_call.1}
  #allocation0 [shape = 'u32[]', space=smem, size = 0x4, offset = 0x4, fixed_abs, tag = 'smem constant byte address 0x4 - core index']
  #allocation1 [shape = 'u32[144,128]{1,0:T(1,128)}', space=vmem, size = 0x12000, scoped, tag = 'internal scratch']
  %s0 = inlined_call_operand.hbm [shape: f32[16,128], index: 0, kind: input, shape index: {}]
  %s1 = inlined_call_operand.hbm [shape: bf16[512,128], index: 1, kind: input, shape index: {}]
  %s2 = inlined_call_operand.hbm [shape: f32[8,128], index: 2, kind: input, shape index: {}]
  %s3 = inlined_call_operand.hbm [shape: f32[16,128], index: 3, kind: output, shape index: {}]
  %s4 = sld [smem:[#allocation0]]
  $region34: #{tpu_custom_call.1} parent=0
    _
  %s6 = ssub.s32 1, %s4
  %s7 = scalar_select 0, %s6, %s4
  $region1: #{tpu_custom_call.1} parent=0
    #allocation2 [shape = 'u8[8192]{0}', space=vmem, size = 0x2000, scoped, tag = 'input window, operand 0, single buffered']
    #allocation3 [shape = 's32[1]{0}', space=sflag, size = 0x4, scoped, tag = 'scoped memory for tpu_custom_call.1']
    #allocation4 [shape = 's32[1]{0}', space=sflag, size = 0x4, scoped, tag = 'scoped memory for tpu_custom_call.1']
    #allocation5 [shape = 'u8[131072]{0}', space=vmem, size = 0x20000, scoped, tag = 'input window, operand 1, single buffered']
    #allocation6 [shape = 's32[1]{0}', space=sflag, size = 0x4, scoped, tag = 'scoped memory for tpu_custom_call.1']
    #allocation7 [shape = 'u8[4096]{0}', space=vmem, size = 0x1000, scoped, tag = 'input window, operand 2, single buffered']
    #allocation8 [shape = 'u8[8192]{0}', space=vmem, size = 0x2000, scoped, tag = 'output window, operand 0, single buffered']
    %8 = vsyncpa [#allocation3], 0
    %9 = vsyncpa [#allocation6], 0
    %10 = vsyncpa [#allocation4], 0
    // Predicated region
    $region2: #{tpu_custom_call.1} parent=1 // pred_check
      _
    $region3: #{tpu_custom_call.1} parent=1 // pred_check_branch
      %12 = sbr.rel (0) target = $region5
    $region4: #{tpu_custom_call.1} parent=1 // pred_region
      %s14 = ssub.s32 256, 256
      %15 = vsyncadd [#allocation3], %s14
      %s16 = sshll.u32 [#allocation2], 4
      %s17 = int_to_ptr.vmem [resolvable:$true] %s16
      %22 = dma.hbm_to_vmem [thread:$0]  %s0, 256, %s17, [#allocation3], 128, 128, 8
    $region5: #{tpu_custom_call.1} parent=1 // pred_fallthru
      _
    // Predicated region
    $region6: #{tpu_custom_call.1} parent=1 // pred_check
      _
    $region7: #{tpu_custom_call.1} parent=1 // pred_check_branch
      %24 = sbr.rel (0) target = $region9
    $region8: #{tpu_custom_call.1} parent=1 // pred_region
      %s26 = ssub.s32 4096, 4096
      %27 = vsyncadd [#allocation6], %s26
      %s28 = sshll.u32 [#allocation5], 4
      %s29 = int_to_ptr.vmem [resolvable:$true] %s28
      %34 = dma.hbm_to_vmem [thread:$0]  %s1, 4096, %s29, [#allocation6], 64, 64, 4
    $region9: #{tpu_custom_call.1} parent=1 // pred_fallthru
      _
    // Predicated region
    $region10: #{tpu_custom_call.1} parent=1 // pred_check
      _
    $region11: #{tpu_custom_call.1} parent=1 // pred_check_branch
      %36 = sbr.rel (0) target = $region13
    $region12: #{tpu_custom_call.1} parent=1 // pred_region
      %s38 = ssub.s32 128, 128
      %39 = vsyncadd [#allocation6], %s38
      %s41 = sshll.u32 [#allocation7], 4
      %s42 = int_to_ptr.vmem [resolvable:$true] %s41
      %44 = dma.hbm_to_vmem [thread:$0]  %s2, 128, %s42, [#allocation6]
    $region13: #{tpu_custom_call.1} parent=1 // pred_fallthru
      _
    // Predicated region
    $region14: #{tpu_custom_call.1} parent=1 // pred_check
      _
    $region15: #{tpu_custom_call.1} parent=1 // pred_check_branch
      %46 = sbr.rel (0) target = $region17
    $region16: #{tpu_custom_call.1} parent=1 // pred_region
      %47 = dma.done [#allocation3], 256
    $region17: #{tpu_custom_call.1} parent=1 // pred_fallthru
      _
    // Predicated region
    $region18: #{tpu_custom_call.1} parent=1 // pred_check
      _
    $region19: #{tpu_custom_call.1} parent=1 // pred_check_branch
      %49 = sbr.rel (0) target = $region21
    $region20: #{tpu_custom_call.1} parent=1 // pred_region
      %50 = dma.done [#allocation6], 4096
    $region21: #{tpu_custom_call.1} parent=1 // pred_fallthru
      _
    // Predicated region
    $region22: #{tpu_custom_call.1} parent=1 // pred_check
      _
    $region23: #{tpu_custom_call.1} parent=1 // pred_check_branch
      %52 = sbr.rel (0) target = $region25
    $region24: #{tpu_custom_call.1} parent=1 // pred_region
      %53 = dma.done [#allocation6], 128
    $region25: #{tpu_custom_call.1} parent=1 // pred_fallthru
      _
    %v55 = vld [vmem:[#allocation2] sm:$0xff]
    %v56 = vld [vmem:[#allocation2 + $0x8] sm:$0xff]
    %v57 = vld [vmem:[#allocation5] sm:$0xf]
    %v58 = vld [vmem:[#allocation5 + $0x4] sm:$0xf]
    %v59 = vld [vmem:[#allocation5 + $0x8] sm:$0xf]
    %v60 = vld [vmem:[#allocation5 + $0xc] sm:$0xf]
    %v61 = vld [vmem:[#allocation5 + $0x10] sm:$0xf]
    %v62 = vld [vmem:[#allocation5 + $0x14] sm:$0xf]
    %v63 = vld [vmem:[#allocation5 + $0x18] sm:$0xf]
    %v64 = vld [vmem:[#allocation5 + $0x1c] sm:$0xf]
    %v65 = vld [vmem:[#allocation5 + $0x20] sm:$0xf]
    %v66 = vld [vmem:[#allocation5 + $0x24] sm:$0xf]
    %v67 = vld [vmem:[#allocation5 + $0x28] sm:$0xf]
    %v68 = vld [vmem:[#allocation5 + $0x2c] sm:$0xf]
    %v69 = vld [vmem:[#allocation5 + $0x30] sm:$0xf]
    %v70 = vld [vmem:[#allocation5 + $0x34] sm:$0xf]
    %v71 = vld [vmem:[#allocation5 + $0x38] sm:$0xf]
    %v72 = vld [vmem:[#allocation5 + $0x3c] sm:$0xf]
    %v73 = vld [vmem:[#allocation5 + $0x40] sm:$0xf]
    %v74 = vld [vmem:[#allocation5 + $0x44] sm:$0xf]
    %v75 = vld [vmem:[#allocation5 + $0x48] sm:$0xf]
    %v76 = vld [vmem:[#allocation5 + $0x4c] sm:$0xf]
    %v77 = vld [vmem:[#allocation5 + $0x50] sm:$0xf]
    %v78 = vld [vmem:[#allocation5 + $0x54] sm:$0xf]
    %v79 = vld [vmem:[#allocation5 + $0x58] sm:$0xf]
    %v80 = vld [vmem:[#allocation5 + $0x5c] sm:$0xf]
    %v81 = vld [vmem:[#allocation5 + $0x60] sm:$0xf]
    %v82 = vld [vmem:[#allocation5 + $0x64] sm:$0xf]
    %v83 = vld [vmem:[#allocation5 + $0x68] sm:$0xf]
    %v84 = vld [vmem:[#allocation5 + $0x6c] sm:$0xf]
    %v85 = vld [vmem:[#allocation5 + $0x70] sm:$0xf]
    %v86 = vld [vmem:[#allocation5 + $0x74] sm:$0xf]
    %v87 = vld [vmem:[#allocation5 + $0x78] sm:$0xf]
    %v88 = vld [vmem:[#allocation5 + $0x7c] sm:$0xf]
    %v89 = vld [vmem:[#allocation5 + $0x80] sm:$0xf]
    %v90 = vld [vmem:[#allocation5 + $0x84] sm:$0xf]
    %v91 = vld [vmem:[#allocation5 + $0x88] sm:$0xf]
    %v92 = vld [vmem:[#allocation5 + $0x8c] sm:$0xf]
    %v93 = vld [vmem:[#allocation5 + $0x90] sm:$0xf]
    %v94 = vld [vmem:[#allocation5 + $0x94] sm:$0xf]
    %v95 = vld [vmem:[#allocation5 + $0x98] sm:$0xf]
    %v96 = vld [vmem:[#allocation5 + $0x9c] sm:$0xf]
    %v97 = vld [vmem:[#allocation5 + $0xa0] sm:$0xf]
    %v98 = vld [vmem:[#allocation5 + $0xa4] sm:$0xf]
    %v99 = vld [vmem:[#allocation5 + $0xa8] sm:$0xf]
    %v100 = vld [vmem:[#allocation5 + $0xac] sm:$0xf]
    %v101 = vld [vmem:[#allocation5 + $0xb0] sm:$0xf]
    %v102 = vld [vmem:[#allocation5 + $0xb4] sm:$0xf]
    %v103 = vld [vmem:[#allocation5 + $0xb8] sm:$0xf]
    %v104 = vld [vmem:[#allocation5 + $0xbc] sm:$0xf]
    %v105 = vld [vmem:[#allocation5 + $0xc0] sm:$0xf]
    %v106 = vld [vmem:[#allocation5 + $0xc4] sm:$0xf]
    %v107 = vld [vmem:[#allocation5 + $0xc8] sm:$0xf]
    %v108 = vld [vmem:[#allocation5 + $0xcc] sm:$0xf]
    %v109 = vld [vmem:[#allocation5 + $0xd0] sm:$0xf]
    %v110 = vld [vmem:[#allocation5 + $0xd4] sm:$0xf]
    %v111 = vld [vmem:[#allocation5 + $0xd8] sm:$0xf]
    %v112 = vld [vmem:[#allocation5 + $0xdc] sm:$0xf]
    %v113 = vld [vmem:[#allocation5 + $0xe0] sm:$0xf]
    %v114 = vld [vmem:[#allocation5 + $0xe4] sm:$0xf]
    %v115 = vld [vmem:[#allocation5 + $0xe8] sm:$0xf]
    %v116 = vld [vmem:[#allocation5 + $0xec] sm:$0xf]
    %v117 = vld [vmem:[#allocation5 + $0xf0] sm:$0xf]
    %v118 = vld [vmem:[#allocation5 + $0xf4] sm:$0xf]
    %v119 = vld [vmem:[#allocation5 + $0xf8] sm:$0xf]
    %v120 = vld [vmem:[#allocation5 + $0xfc] sm:$0xf]
    %v121 = vld [vmem:[#allocation7] sm:$0x1]
    %v122 = vld [vmem:[#allocation7 + $0x1] sm:$0x1]
    %v123 = vld [vmem:[#allocation7 + $0x2] sm:$0x1]
    %v124 = vld [vmem:[#allocation7 + $0x3] sm:$0x1]
    %v125 = vld [vmem:[#allocation7 + $0x4] sm:$0x1]
    %v126 = vpack.c.bf16 %v56, %v55
    %v127 = vlaneseq
    %v128 = vshrl.u32 %v127, 7
    %v129 = vsub.s32 0, %v128
    %v130 = vrot.slane %v121, %v129
    %v147 = vunpack.c.l.b16 %v57
    %v148 = vunpack.c.l.b16 %v58
    %v149 = vunpack.c.l.b16 %v59
    %v150 = vunpack.c.l.b16 %v60
    %v151 = vunpack.c.l.b16 %v61
    %v152 = vunpack.c.l.b16 %v62
    %v153 = vunpack.c.l.b16 %v63
    %v154 = vunpack.c.l.b16 %v64
    %v155 = vunpack.c.l.b16 %v65
    %v156 = vunpack.c.l.b16 %v66
    %v157 = vunpack.c.l.b16 %v67
    %v158 = vunpack.c.l.b16 %v68
    %v159 = vunpack.c.l.b16 %v69
    %v160 = vunpack.c.l.b16 %v70
    %v161 = vunpack.c.l.b16 %v71
    %v162 = vunpack.c.l.b16 %v72
    %v163 = vpack.c.b16 %v148, %v147
    %v164 = vpack.c.b16 %v150, %v149
    %v165 = vpack.c.b16 %v152, %v151
    %v166 = vpack.c.b16 %v154, %v153
    %v167 = vpack.c.b16 %v156, %v155
    %v168 = vpack.c.b16 %v158, %v157
    %v169 = vpack.c.b16 %v160, %v159
    %v170 = vpack.c.b16 %v162, %v161
    %179 = vmatprep.subr.bf16.mxu0 0
    %180 = vmatpush1.bf16.msra.mxu0 %v163
    %181 = vmatprep.subr.bf16.mxu0 0
    %182 = vmatpush1.bf16.msra.mxu0 %v164
    %183 = vmatprep.subr.bf16.mxu0 0
    %184 = vmatpush1.bf16.msra.mxu0 %v165
    %185 = vmatprep.subr.bf16.mxu0 0
    %186 = vmatpush1.bf16.msra.mxu0 %v166
    %187 = vmatprep.subr.bf16.mxu0 0
    %188 = vmatpush1.bf16.msra.mxu0 %v167
    %189 = vmatprep.subr.bf16.mxu0 0
    %190 = vmatpush1.bf16.msra.mxu0 %v168
    %191 = vmatprep.subr.bf16.mxu0 0
    %192 = vmatpush1.bf16.msra.mxu0 %v169
    %193 = vmatprep.subr.bf16.mxu0 0
    %194 = vmatpush1.bf16.msra.mxu0 %v170
    %195 = vmatprep.subr.bf16.mxu0 0
    %196 = vmatpush1.bf16.msra.mxu0 0
    %197 = vmatprep.subr.bf16.mxu0 0
    %198 = vmatpush1.bf16.msra.mxu0 0
    %199 = vmatprep.subr.bf16.mxu0 0
    %200 = vmatpush1.bf16.msra.mxu0 0
    %201 = vmatprep.subr.bf16.mxu0 0
    %202 = vmatpush1.bf16.msra.mxu0 0
    %203 = vmatprep.subr.bf16.mxu0 0
    %204 = vmatpush1.bf16.msra.mxu0 0
    %205 = vmatprep.subr.bf16.mxu0 0
    %206 = vmatpush1.bf16.msra.mxu0 0
    %207 = vmatprep.subr.bf16.mxu0 0
    %208 = vmatpush1.bf16.msra.mxu0 0
    %209 = vmatprep.subr.bf16.mxu0 0
    %210 = vmatpush1.bf16.msra.mxu0 0
    %211 = vmatprep.mubr.bf16.mxu0 0
    %212 = vmatmul.mubr.bf16.gmra.mrb[0].mxu0 %v126
    %v213 = vpop.f32.mrb[0].mxu0
    %v214 = vadd.f32 %v130, %v213
    %v215 = vpop.f32.mrb[0].mxu0
    %v216 = vpop.f32.mrb[0].mxu0
    %v217 = vadd.f32 %v130, %v216
    %v218 = vpop.f32.mrb[0].mxu0
    %219 = vdwg.mxu0
    %v220 = vtanh.pop %v214
    %v221 = vtanh.pop %v217
    %v222 = vpack.c.bf16 %v221, %v220
    %v223 = vlaneseq
    %v224 = vshrl.u32 %v223, 7
    %v225 = vsub.s32 0, %v224
    %v226 = vrot.slane %v122, %v225
    %v243 = vunpack.c.l.b16 %v73
    %v244 = vunpack.c.l.b16 %v74
    %v245 = vunpack.c.l.b16 %v75
    %v246 = vunpack.c.l.b16 %v76
    %v247 = vunpack.c.l.b16 %v77
    %v248 = vunpack.c.l.b16 %v78
    %v249 = vunpack.c.l.b16 %v79
    %v250 = vunpack.c.l.b16 %v80
    %v251 = vunpack.c.l.b16 %v81
    %v252 = vunpack.c.l.b16 %v82
    %v253 = vunpack.c.l.b16 %v83
    %v254 = vunpack.c.l.b16 %v84
    %v255 = vunpack.c.l.b16 %v85
    %v256 = vunpack.c.l.b16 %v86
    %v257 = vunpack.c.l.b16 %v87
    %v258 = vunpack.c.l.b16 %v88
    %v259 = vpack.c.b16 %v244, %v243
    %v260 = vpack.c.b16 %v246, %v245
    %v261 = vpack.c.b16 %v248, %v247
    %v262 = vpack.c.b16 %v250, %v249
    %v263 = vpack.c.b16 %v252, %v251
    %v264 = vpack.c.b16 %v254, %v253
    %v265 = vpack.c.b16 %v256, %v255
    %v266 = vpack.c.b16 %v258, %v257
    %275 = vmatprep.subr.bf16.mxu0 0
    %276 = vmatpush1.bf16.msra.mxu0 %v259
    %277 = vmatprep.subr.bf16.mxu0 0
    %278 = vmatpush1.bf16.msra.mxu0 %v260
    %279 = vmatprep.subr.bf16.mxu0 0
    %280 = vmatpush1.bf16.msra.mxu0 %v261
    %281 = vmatprep.subr.bf16.mxu0 0
    %282 = vmatpush1.bf16.msra.mxu0 %v262
    %283 = vmatprep.subr.bf16.mxu0 0
    %284 = vmatpush1.bf16.msra.mxu0 %v263
    %285 = vmatprep.subr.bf16.mxu0 0
    %286 = vmatpush1.bf16.msra.mxu0 %v264
    %287 = vmatprep.subr.bf16.mxu0 0
    %288 = vmatpush1.bf16.msra.mxu0 %v265
    %289 = vmatprep.subr.bf16.mxu0 0
    %290 = vmatpush1.bf16.msra.mxu0 %v266
    %291 = vmatprep.subr.bf16.mxu0 0
    %292 = vmatpush1.bf16.msra.mxu0 0
    %293 = vmatprep.subr.bf16.mxu0 0
    %294 = vmatpush1.bf16.msra.mxu0 0
    %295 = vmatprep.subr.bf16.mxu0 0
    %296 = vmatpush1.bf16.msra.mxu0 0
    %297 = vmatprep.subr.bf16.mxu0 0
    %298 = vmatpush1.bf16.msra.mxu0 0
    %299 = vmatprep.subr.bf16.mxu0 0
    %300 = vmatpush1.bf16.msra.mxu0 0
    %301 = vmatprep.subr.bf16.mxu0 0
    %302 = vmatpush1.bf16.msra.mxu0 0
    %303 = vmatprep.subr.bf16.mxu0 0
    %304 = vmatpush1.bf16.msra.mxu0 0
    %305 = vmatprep.subr.bf16.mxu0 0
    %306 = vmatpush1.bf16.msra.mxu0 0
    %307 = vmatprep.mubr.bf16.mxu0 0
    %308 = vmatmul.mubr.bf16.gmra.mrb[0].mxu0 %v222
    %v309 = vpop.f32.mrb[0].mxu0
    %v310 = vadd.f32 %v226, %v309
    %v311 = vpop.f32.mrb[0].mxu0
    %v312 = vpop.f32.mrb[0].mxu0
    %v313 = vadd.f32 %v226, %v312
    %v314 = vpop.f32.mrb[0].mxu0
    %315 = vdwg.mxu0
    %v316 = vtanh.pop %v310
    %v317 = vtanh.pop %v313
    %v318 = vlaneseq
    %v319 = vshrl.u32 %v318, 7
    %v320 = vsub.s32 0, %v319
    %v321 = vrot.slane %v123, %v320
    %v322 = vmul.f32 %v316, %v321
    %v323 = vmul.f32 %v317, %v321
    %324 = vadd.xlane.f32.xlu0 %v322
    %v325 = vpop.xlane.xlu0 %324
    %326 = vadd.xlane.f32.xlu0 %v323
    %v327 = vpop.xlane.xlu0 %326
    %v328 = vmul.f32 %v316, %v316
    %v329 = vmul.f32 %v317, %v317
    %v330 = vsub.f32 1.0, %v328
    %v331 = vsub.f32 1.0, %v329
    %v332 = vpack.c.bf16 %v331, %v330
    %v349 = vunpack.c.l.b16 %v89
    %v350 = vunpack.c.l.b16 %v90
    %v351 = vunpack.c.l.b16 %v91
    %v352 = vunpack.c.l.b16 %v92
    %v353 = vunpack.c.l.b16 %v93
    %v354 = vunpack.c.l.b16 %v94
    %v355 = vunpack.c.l.b16 %v95
    %v356 = vunpack.c.l.b16 %v96
    %v357 = vunpack.c.l.b16 %v97
    %v358 = vunpack.c.l.b16 %v98
    %v359 = vunpack.c.l.b16 %v99
    %v360 = vunpack.c.l.b16 %v100
    %v361 = vunpack.c.l.b16 %v101
    %v362 = vunpack.c.l.b16 %v102
    %v363 = vunpack.c.l.b16 %v103
    %v364 = vunpack.c.l.b16 %v104
    %v365 = vpack.c.b16 %v350, %v349
    %v366 = vpack.c.b16 %v352, %v351
    %v367 = vpack.c.b16 %v354, %v353
    %v368 = vpack.c.b16 %v356, %v355
    %v369 = vpack.c.b16 %v358, %v357
    %v370 = vpack.c.b16 %v360, %v359
    %v371 = vpack.c.b16 %v362, %v361
    %v372 = vpack.c.b16 %v364, %v363
    %381 = vmatprep.subr.bf16.mxu0 0
    %382 = vmatpush1.bf16.msra.mxu0 %v365
    %383 = vmatprep.subr.bf16.mxu0 0
    %384 = vmatpush1.bf16.msra.mxu0 %v366
    %385 = vmatprep.subr.bf16.mxu0 0
    %386 = vmatpush1.bf16.msra.mxu0 %v367
    %387 = vmatprep.subr.bf16.mxu0 0
    %388 = vmatpush1.bf16.msra.mxu0 %v368
    %389 = vmatprep.subr.bf16.mxu0 0
    %390 = vmatpush1.bf16.msra.mxu0 %v369
    %391 = vmatprep.subr.bf16.mxu0 0
    %392 = vmatpush1.bf16.msra.mxu0 %v370
    %393 = vmatprep.subr.bf16.mxu0 0
    %394 = vmatpush1.bf16.msra.mxu0 %v371
    %395 = vmatprep.subr.bf16.mxu0 0
    %396 = vmatpush1.bf16.msra.mxu0 %v372
    %397 = vmatprep.subr.bf16.mxu0 0
    %398 = vmatpush1.bf16.msra.mxu0 0
    %399 = vmatprep.subr.bf16.mxu0 0
    %400 = vmatpush1.bf16.msra.mxu0 0
    %401 = vmatprep.subr.bf16.mxu0 0
    %402 = vmatpush1.bf16.msra.mxu0 0
    %403 = vmatprep.subr.bf16.mxu0 0
    %404 = vmatpush1.bf16.msra.mxu0 0
    %405 = vmatprep.subr.bf16.mxu0 0
    %406 = vmatpush1.bf16.msra.mxu0 0
    %407 = vmatprep.subr.bf16.mxu0 0
    %408 = vmatpush1.bf16.msra.mxu0 0
    %409 = vmatprep.subr.bf16.mxu0 0
    %410 = vmatpush1.bf16.msra.mxu0 0
    %411 = vmatprep.subr.bf16.mxu0 0
    %412 = vmatpush1.bf16.msra.mxu0 0
    %413 = vmatprep.mubr.bf16.mxu0 0
    %414 = vmatmul.mubr.bf16.gmra.mrb[0].mxu0 %v332
    %v415 = vpop.f32.mrb[0].mxu0
    %v416 = vadd.f32 0.0, %v415
    %v417 = vpop.f32.mrb[0].mxu0
    %v418 = vpop.f32.mrb[0].mxu0
    %v419 = vadd.f32 0.0, %v418
    %v420 = vpop.f32.mrb[0].mxu0
    %421 = vdwg.mxu0
    %v422 = vmul.f32 %v220, %v220
    %v423 = vmul.f32 %v221, %v221
    %v424 = vsub.f32 1.0, %v422
    %v425 = vsub.f32 1.0, %v423
    %v426 = vmul.f32 %v416, %v424
    %v427 = vmul.f32 %v419, %v425
    %v428 = vpack.c.bf16 %v427, %v426
    %v429 = vlaneseq
    %v430 = vshrl.u32 %v429, 7
    %v431 = vsub.s32 0, %v430
    %v432 = vrot.slane %v125, %v431
    %v433 = vadd.f32 %v325, %v432
    %v434 = vadd.f32 %v327, %v432
    %436 = vset.pattern.permute.xlu0 0
    %437 = vperm.xlu0 %436, %v433
    %v438 = vpop.permute.xlu0 %437
    %441 = vset.pattern.permute.xlu0 0
    %442 = vperm.xlu0 %441, %v434
    %v443 = vpop.permute.xlu0 %442
    %v445 = vlaneseq
    %v446 = vshrl.u32 %v445, 7
    %v447 = vsub.s32 0, %v446
    %v448 = vrot.slane %v124, %v447
    %v449 = vmul.f32 %v438, %v448
    %v450 = vmul.f32 %v443, %v448
    %v467 = vunpack.c.l.b16 %v105
    %v468 = vunpack.c.l.b16 %v106
    %v469 = vunpack.c.l.b16 %v107
    %v470 = vunpack.c.l.b16 %v108
    %v471 = vunpack.c.l.b16 %v109
    %v472 = vunpack.c.l.b16 %v110
    %v473 = vunpack.c.l.b16 %v111
    %v474 = vunpack.c.l.b16 %v112
    %v475 = vunpack.c.l.b16 %v113
    %v476 = vunpack.c.l.b16 %v114
    %v477 = vunpack.c.l.b16 %v115
    %v478 = vunpack.c.l.b16 %v116
    %v479 = vunpack.c.l.b16 %v117
    %v480 = vunpack.c.l.b16 %v118
    %v481 = vunpack.c.l.b16 %v119
    %v482 = vunpack.c.l.b16 %v120
    %v483 = vpack.c.b16 %v468, %v467
    %v484 = vpack.c.b16 %v470, %v469
    %v485 = vpack.c.b16 %v472, %v471
    %v486 = vpack.c.b16 %v474, %v473
    %v487 = vpack.c.b16 %v476, %v475
    %v488 = vpack.c.b16 %v478, %v477
    %v489 = vpack.c.b16 %v480, %v479
    %v490 = vpack.c.b16 %v482, %v481
    %499 = vmatprep.subr.bf16.mxu0 0
    %500 = vmatpush1.bf16.msra.mxu0 %v483
    %501 = vmatprep.subr.bf16.mxu0 0
    %502 = vmatpush1.bf16.msra.mxu0 %v484
    %503 = vmatprep.subr.bf16.mxu0 0
    %504 = vmatpush1.bf16.msra.mxu0 %v485
    %505 = vmatprep.subr.bf16.mxu0 0
    %506 = vmatpush1.bf16.msra.mxu0 %v486
    %507 = vmatprep.subr.bf16.mxu0 0
    %508 = vmatpush1.bf16.msra.mxu0 %v487
    %509 = vmatprep.subr.bf16.mxu0 0
    %510 = vmatpush1.bf16.msra.mxu0 %v488
    %511 = vmatprep.subr.bf16.mxu0 0
    %512 = vmatpush1.bf16.msra.mxu0 %v489
    %513 = vmatprep.subr.bf16.mxu0 0
    %514 = vmatpush1.bf16.msra.mxu0 %v490
    %515 = vmatprep.subr.bf16.mxu0 0
    %516 = vmatpush1.bf16.msra.mxu0 0
    %517 = vmatprep.subr.bf16.mxu0 0
    %518 = vmatpush1.bf16.msra.mxu0 0
    %519 = vmatprep.subr.bf16.mxu0 0
    %520 = vmatpush1.bf16.msra.mxu0 0
    %521 = vmatprep.subr.bf16.mxu0 0
    %522 = vmatpush1.bf16.msra.mxu0 0
    %523 = vmatprep.subr.bf16.mxu0 0
    %524 = vmatpush1.bf16.msra.mxu0 0
    %525 = vmatprep.subr.bf16.mxu0 0
    %526 = vmatpush1.bf16.msra.mxu0 0
    %527 = vmatprep.subr.bf16.mxu0 0
    %528 = vmatpush1.bf16.msra.mxu0 0
    %529 = vmatprep.subr.bf16.mxu0 0
    %530 = vmatpush1.bf16.msra.mxu0 0
    %531 = vmatprep.mubr.bf16.mxu0 0
    %532 = vmatmul.mubr.bf16.gmra.mrb[0].mxu0 %v428
    %v533 = vpop.f32.mrb[0].mxu0
    %v534 = vadd.f32 %v449, %v533
    %v535 = vpop.f32.mrb[0].mxu0
    %v536 = vpop.f32.mrb[0].mxu0
    %v537 = vadd.f32 %v450, %v536
    %v538 = vpop.f32.mrb[0].mxu0
    %539 = vdwg.mxu0
    %540 = vst [vmem:[#allocation8] sm:$0xff] %v534
    %541 = vst [vmem:[#allocation8 + $0x8] sm:$0xff] %v537
    // Predicated region
    $region26: #{tpu_custom_call.1} parent=1 // pred_check
      _
    $region27: #{tpu_custom_call.1} parent=1 // pred_check_branch
      %543 = sbr.rel (0) target = $region29
    $region28: #{tpu_custom_call.1} parent=1 // pred_region
      %s545 = ssub.s32 256, 256
      %546 = vsyncadd [#allocation4], %s545
      %s547 = sshll.u32 [#allocation8], 4
      %s548 = int_to_ptr.vmem [resolvable:$true] %s547
      %553 = dma.vmem_to_hbm [thread:$0]  %s548, 256, %s3, [#allocation4], 128, 128, 8
    $region29: #{tpu_custom_call.1} parent=1 // pred_fallthru
      _
    // Predicated region
    $region30: #{tpu_custom_call.1} parent=1 // pred_check
      _
    $region31: #{tpu_custom_call.1} parent=1 // pred_check_branch
      %555 = sbr.rel (0) target = $region33
    $region32: #{tpu_custom_call.1} parent=1 // pred_region
      %556 = dma.done [#allocation4], 256
    $region33: #{tpu_custom_call.1} parent=1 // pred_fallthru
      _
    %557 = vsyncpa [#allocation3], 1
    %558 = vsyncpa [#allocation6], 1
    %559 = vsyncpa [#allocation4], 1

</llo_original>
